<compile_context>
chip_gen: v7x
topology: tpu7x:2x2x1
jax: 0.10.0
libtpu: 0.0.40
codegen_flags: <defaults>
</compile_context>

<pallas_src>
import functools

import jax
import jax.numpy as jnp
from jax import lax
from jax.experimental import pallas as pl
from jax.experimental.pallas import tpu as pltpu


def _composite_noise_kernel(x_ref, lat_ref, sel_ref, out_ref, *, freqs, G,
                            n_fields):
    """One tile of points (points on the lane axis), all components fused."""
    x = x_ref[...].astype(jnp.float32)                  # (n_dims=2, tb)
    tb = x.shape[1]
    nfG = n_fields * G
    pow2 = (G & (G - 1)) == 0                           # static python bool

    lat = lat_ref[...]                                  # (n_comp*nfG, G), VMEM resident
    sel = sel_ref[...]                                  # (npf, nfG) constant 0/1 selector

    # Lattice-coordinate iota, (G, 1): broadcasts against (1, tb) lane vectors.
    g_iota = lax.broadcasted_iota(jnp.int32, (G, 1), 0)

    acc = jnp.zeros((out_ref.shape[0], tb), jnp.float32)

    for k, freq in enumerate(freqs):                    # static, small unroll
        p = x * jnp.float32(freq)                       # scale into lattice space
        pi = jnp.floor(p)
        pf = p - pi                                     # fractional part in [0,1)
        pii = pi.astype(jnp.int32)
        if pow2:                                        # fast wrap for pow2 lattices
            i0 = pii & (G - 1)
        else:
            i0 = jnp.mod(pii, G)
        ix, iy = i0[0:1, :], i0[1:2, :]                 # (1, tb) lane vectors
        if pow2:
            ix1 = (ix + 1) & (G - 1)
            iy1 = (iy + 1) & (G - 1)
        else:
            ix1 = jnp.mod(ix + 1, G)
            iy1 = jnp.mod(iy + 1, G)

        u = pf * pf * (3.0 - 2.0 * pf)                  # smoothstep fade, (2, tb)
        ux, uy = u[0:1, :], u[1:2, :]

        # Separable bilinear one-hot weights, (G, tb) each.
        wy = (jnp.where(g_iota == iy, 1.0 - uy, 0.0)
              + jnp.where(g_iota == iy1, uy, 0.0))
        wx = (jnp.where(g_iota == ix, 1.0 - ux, 0.0)
              + jnp.where(g_iota == ix1, ux, 0.0))

        # Stage 1 (MXU): contract over gy.
        #   t[f*G + gx, p] = sum_gy lat[k, f*G + gx, gy] * wy[gy, p]
        a_k = lat[k * nfG:(k + 1) * nfG, :]             # static, tile-aligned slice
        t = jnp.dot(a_k, wy, preferred_element_type=jnp.float32)    # (nfG, tb)

        # Stage 2: apply the per-point gx weights (VPU), then one constant 0/1
        # matmul (MXU) reduces over gx, pads the field axis to the 8-row
        # output tile and accumulates the composite sum over components.
        prod = t * jnp.tile(wx, (n_fields, 1))          # (nfG, tb)
        acc = acc + jnp.dot(sel, prod, preferred_element_type=jnp.float32)

    out_ref[...] = acc.astype(out_ref.dtype)


def composite_noise(x, grids, freqs, *, grid_size, tb=1024,
                    fields_major_output=False):
    """CompositeNoise forward.

    x:     (N, n_dims) float32 query points.
    grids: (n_components, grid_size**2, n_fields) value lattices.
    freqs: per-component lattice frequency.
    Returns (N, n_fields); pass fields_major_output=True to get (n_fields, N)
    and skip the final transpose pass if the consumer tolerates that layout.
    """
    N, n_dims = x.shape
    n_comp, gg, n_fields = grids.shape
    G = int(grid_size)
    assert gg == G * G
    assert n_comp == len(freqs)
    assert n_dims == 2, "synthesized components are 2-D value noise"  # TODO(synk): other n_dims
    assert tb % 128 == 0

    npf = ((n_fields + 7) // 8) * 8         # output rows padded to a sublane multiple
    nfG = n_fields * G

    # Target >= 4 grid steps so v7x's two TensorCores both get balanced work
    # under dimension_semantics=("parallel",); keep tiles >= 128 lanes.
    while tb > 128 and pl.cdiv(N, tb) < 4:
        tb //= 2

    # Lane-dense layout: points ride the lane (minor) axis.
    xt = jnp.asarray(x, jnp.float32).T                               # (n_dims, N)

    # Separable lattice layout: A[k*nfG + f*G + gx, gy] = grids[k, gx*G+gy, f]
    lat = jnp.asarray(grids, jnp.float32).reshape(n_comp, G, G, n_fields)
    lat = lat.transpose(0, 3, 1, 2).reshape(n_comp * nfG, G)

    # Constant selector: sel[f, f*G + gx] = 1; rows >= n_fields stay zero
    # (they are the field padding).
    sel = (jnp.arange(nfG)[None, :] // G
           == jnp.arange(npf)[:, None]).astype(jnp.float32)          # (npf, nfG)

    n_pad = (-N) % tb                                   # cdiv-style tail padding
    if n_pad:
        xt = jnp.pad(xt, ((0, 0), (0, n_pad)))
    n_total = N + n_pad

    kernel = functools.partial(
        _composite_noise_kernel,
        freqs=tuple(float(f) for f in freqs),
        G=G,
        n_fields=n_fields,
    )

    out_t = pl.pallas_call(
        kernel,
        out_shape=jax.ShapeDtypeStruct((npf, n_total), jnp.float32),
        grid=(n_total // tb,),
        in_specs=[
            pl.BlockSpec((n_dims, tb), lambda i: (0, i)),
            # Constant index maps -> lattice & selector stay VMEM resident.
            pl.BlockSpec((n_comp * nfG, G), lambda i: (0, 0)),
            pl.BlockSpec((npf, nfG), lambda i: (0, 0)),
        ],
        out_specs=pl.BlockSpec((npf, tb), lambda i: (0, i)),
        compiler_params=pltpu.CompilerParams(
            dimension_semantics=("parallel",)),
    )(xt, lat, sel)

    if fields_major_output:
        return out_t[:n_fields, :N]
    return out_t[:n_fields, :N].T                        # back to (N, n_fields)


# ---------------- pure-JAX reference (for verification) ----------------
def _value_noise_ref(x, lattice, freq, G):
    p = x * freq
    pi = jnp.floor(p)
    pf = p - pi
    i = jnp.mod(pi.astype(jnp.int32), G)
    ix, iy = i[:, 0], i[:, 1]
    ix1, iy1 = (ix + 1) % G, (iy + 1) % G
    u = pf * pf * (3.0 - 2.0 * pf)
    ux, uy = u[:, 0:1], u[:, 1:2]

    def g(a, b):
        return lattice[a * G + b]

    c00, c01, c10, c11 = g(ix, iy), g(ix, iy1), g(ix1, iy), g(ix1, iy1)
    cx0 = c00 + uy * (c01 - c00)
    cx1 = c10 + uy * (c11 - c10)
    return cx0 + ux * (cx1 - cx0)


def composite_noise_ref(x, grids, freqs, grid_size):
    out = jnp.zeros((x.shape[0], grids.shape[-1]), jnp.float32)
    for k in range(grids.shape[0]):
        out = out + _value_noise_ref(x, grids[k], freqs[k], grid_size)
    return out


if __name__ == "__main__":
    # Module hyper-parameters implied by CompositeNoise.__init__:
    n_components = 2          # len(component_models)
    n_dims = 2                # component_models[0].n_dims
    n_fields = 4              # component_models[0].n_fields
    grid_size = 8             # value-noise lattice resolution (pow2 fast path)
    num_points = 1000         # NOT a multiple of tb -> exercises tail handling

    key = jax.random.PRNGKey(0)
    k_x, k_g = jax.random.split(key)

    # Deterministic parameter init (synthetic ValueNoise lattices).
    # TODO(synk): plug in real PerlinNoise/ValueNoise parameters if their
    # definitions become available; only the composite sum is specified here.
    grids = jax.random.normal(
        k_g, (n_components, grid_size * grid_size, n_fields), jnp.float32)
    freqs = (1.0, 2.5)        # one frequency per component model

    # Query points in a positive domain.
    x = jax.random.uniform(k_x, (num_points, n_dims), jnp.float32) * 10.0

    out = composite_noise(x, grids, freqs, grid_size=grid_size)
    out = jax.block_until_ready(out)

    ref = composite_noise_ref(x, grids, freqs, grid_size)
    assert out.shape == (num_points, n_fields)
    # 5e-5: two chained f32 MXU matmuls (K=8 and K=32) per component.
    assert jnp.allclose(out, ref, atol=5e-5, rtol=5e-5), "mismatch vs reference"

    print("KERNEL_OK")
</pallas_src>

<mosaic_0001>
module attributes {stable_mosaic.version = 11 : i64} {
  func.func @_composite_noise_kernel(%arg0: i32, %arg1: memref<2x256xf32, #tpu.memory_space<vmem>>, %arg2: memref<64x8xf32, #tpu.memory_space<vmem>>, %arg3: memref<8x32xf32, #tpu.memory_space<vmem>>, %arg4: memref<8x256xf32, #tpu.memory_space<vmem>>) attributes {dimension_semantics = [#tpu.dimension_semantics<parallel>], iteration_bounds = array<i64: 4>, scalar_prefetch = 0 : i64, scratch_operands = 0 : i64, tpu.core_type = #tpu.core_type<tc>, window_params = [{transform_indices = @transform_0, window_bounds = array<i64: 2, 256>}, {pipeline_mode = #tpu.pipeline_mode<synchronous>, transform_indices = @transform_1, window_bounds = array<i64: 64, 8>}, {pipeline_mode = #tpu.pipeline_mode<synchronous>, transform_indices = @transform_2, window_bounds = array<i64: 8, 32>}, {transform_indices = @transform_3, window_bounds = array<i64: 8, 256>}]} {
    %c0 = arith.constant 0 : index
    %c0_0 = arith.constant 0 : index
    %0 = vector.load %arg1[%c0, %c0_0] : memref<2x256xf32, #tpu.memory_space<vmem>>, vector<2x256xf32>
    %c0_1 = arith.constant 0 : index
    %c0_2 = arith.constant 0 : index
    %1 = vector.load %arg2[%c0_1, %c0_2] : memref<64x8xf32, #tpu.memory_space<vmem>>, vector<64x8xf32>
    %c0_3 = arith.constant 0 : index
    %c0_4 = arith.constant 0 : index
    %2 = vector.load %arg3[%c0_3, %c0_4] : memref<8x32xf32, #tpu.memory_space<vmem>>, vector<8x32xf32>
    %3 = tpu.iota {dimensions = array<i32: 0>} : vector<8x1xi32>
    %cst = arith.constant 0.000000e+00 : f32
    %4 = vector.broadcast %cst : f32 to vector<8x256xf32>
    %cst_5 = arith.constant 1.000000e+00 : f32
    %5 = vector.broadcast %cst_5 : f32 to vector<2x256xf32>
    %6 = arith.mulf %0, %5 : vector<2x256xf32>
    %7 = math.floor %6 : vector<2x256xf32>
    %8 = arith.subf %6, %7 : vector<2x256xf32>
    %9 = arith.fptosi %7 : vector<2x256xf32> to vector<2x256xi32>
    %c7_i32 = arith.constant 7 : i32
    %10 = vector.broadcast %c7_i32 : i32 to vector<2x256xi32>
    %11 = arith.andi %9, %10 : vector<2x256xi32>
    %12 = vector.extract_strided_slice %11 {offsets = [0, 0], sizes = [1, 256], strides = [1, 1]} : vector<2x256xi32> to vector<1x256xi32>
    %13 = vector.extract_strided_slice %11 {offsets = [1, 0], sizes = [1, 256], strides = [1, 1]} : vector<2x256xi32> to vector<1x256xi32>
    %c1_i32 = arith.constant 1 : i32
    %14 = vector.broadcast %c1_i32 : i32 to vector<1x256xi32>
    %15 = arith.addi %12, %14 : vector<1x256xi32>
    %c7_i32_6 = arith.constant 7 : i32
    %16 = vector.broadcast %c7_i32_6 : i32 to vector<1x256xi32>
    %17 = arith.andi %15, %16 : vector<1x256xi32>
    %c1_i32_7 = arith.constant 1 : i32
    %18 = vector.broadcast %c1_i32_7 : i32 to vector<1x256xi32>
    %19 = arith.addi %13, %18 : vector<1x256xi32>
    %c7_i32_8 = arith.constant 7 : i32
    %20 = vector.broadcast %c7_i32_8 : i32 to vector<1x256xi32>
    %21 = arith.andi %19, %20 : vector<1x256xi32>
    %22 = arith.mulf %8, %8 : vector<2x256xf32>
    %cst_9 = arith.constant 2.000000e+00 : f32
    %23 = vector.broadcast %cst_9 : f32 to vector<2x256xf32>
    %24 = arith.mulf %23, %8 : vector<2x256xf32>
    %cst_10 = arith.constant 3.000000e+00 : f32
    %25 = vector.broadcast %cst_10 : f32 to vector<2x256xf32>
    %26 = arith.subf %25, %24 : vector<2x256xf32>
    %27 = arith.mulf %22, %26 : vector<2x256xf32>
    %28 = vector.extract_strided_slice %27 {offsets = [0, 0], sizes = [1, 256], strides = [1, 1]} : vector<2x256xf32> to vector<1x256xf32>
    %29 = vector.extract_strided_slice %27 {offsets = [1, 0], sizes = [1, 256], strides = [1, 1]} : vector<2x256xf32> to vector<1x256xf32>
    %30 = vector.broadcast %3 : vector<8x1xi32> to vector<8x256xi32>
    %31 = vector.broadcast %13 : vector<1x256xi32> to vector<8x256xi32>
    %32 = arith.cmpi eq, %30, %31 : vector<8x256xi32>
    %cst_11 = arith.constant 1.000000e+00 : f32
    %33 = vector.broadcast %cst_11 : f32 to vector<1x256xf32>
    %34 = arith.subf %33, %29 : vector<1x256xf32>
    %cst_12 = arith.constant 0.000000e+00 : f32
    %35 = vector.shape_cast %34 : vector<1x256xf32> to vector<1x256xf32>
    %36 = vector.broadcast %35 : vector<1x256xf32> to vector<8x256xf32>
    %37 = vector.broadcast %cst_12 : f32 to vector<8x256xf32>
    %38 = arith.select %32, %36, %37 : vector<8x256xi1>, vector<8x256xf32>
    %39 = vector.broadcast %3 : vector<8x1xi32> to vector<8x256xi32>
    %40 = vector.broadcast %21 : vector<1x256xi32> to vector<8x256xi32>
    %41 = arith.cmpi eq, %39, %40 : vector<8x256xi32>
    %cst_13 = arith.constant 0.000000e+00 : f32
    %42 = vector.shape_cast %29 : vector<1x256xf32> to vector<1x256xf32>
    %43 = vector.broadcast %42 : vector<1x256xf32> to vector<8x256xf32>
    %44 = vector.broadcast %cst_13 : f32 to vector<8x256xf32>
    %45 = arith.select %41, %43, %44 : vector<8x256xi1>, vector<8x256xf32>
    %46 = arith.addf %38, %45 : vector<8x256xf32>
    %47 = vector.broadcast %3 : vector<8x1xi32> to vector<8x256xi32>
    %48 = vector.broadcast %12 : vector<1x256xi32> to vector<8x256xi32>
    %49 = arith.cmpi eq, %47, %48 : vector<8x256xi32>
    %cst_14 = arith.constant 1.000000e+00 : f32
    %50 = vector.broadcast %cst_14 : f32 to vector<1x256xf32>
    %51 = arith.subf %50, %28 : vector<1x256xf32>
    %cst_15 = arith.constant 0.000000e+00 : f32
    %52 = vector.shape_cast %51 : vector<1x256xf32> to vector<1x256xf32>
    %53 = vector.broadcast %52 : vector<1x256xf32> to vector<8x256xf32>
    %54 = vector.broadcast %cst_15 : f32 to vector<8x256xf32>
    %55 = arith.select %49, %53, %54 : vector<8x256xi1>, vector<8x256xf32>
    %56 = vector.broadcast %3 : vector<8x1xi32> to vector<8x256xi32>
    %57 = vector.broadcast %17 : vector<1x256xi32> to vector<8x256xi32>
    %58 = arith.cmpi eq, %56, %57 : vector<8x256xi32>
    %cst_16 = arith.constant 0.000000e+00 : f32
    %59 = vector.shape_cast %28 : vector<1x256xf32> to vector<1x256xf32>
    %60 = vector.broadcast %59 : vector<1x256xf32> to vector<8x256xf32>
    %61 = vector.broadcast %cst_16 : f32 to vector<8x256xf32>
    %62 = arith.select %58, %60, %61 : vector<8x256xi1>, vector<8x256xf32>
    %63 = arith.addf %55, %62 : vector<8x256xf32>
    %64 = vector.extract_strided_slice %1 {offsets = [0, 0], sizes = [32, 8], strides = [1, 1]} : vector<64x8xf32> to vector<32x8xf32>
    %cst_17 = arith.constant dense<0.000000e+00> : vector<32x256xf32>
    %65 = tpu.matmul %64, %46, %cst_17 {dimension_numbers = #tpu.dot_dimension_numbers<[1], [0], [0], [1], [0, 0, 1, 1], [], []>} : vector<32x8xf32>, vector<8x256xf32>, vector<32x256xf32> -> vector<32x256xf32>
    %66 = tpu.concatenate %63, %63, %63, %63 in 0 : vector<8x256xf32>, vector<8x256xf32>, vector<8x256xf32>, vector<8x256xf32> -> vector<32x256xf32>
    %67 = arith.mulf %65, %66 : vector<32x256xf32>
    %cst_18 = arith.constant dense<0.000000e+00> : vector<8x256xf32>
    %68 = tpu.matmul %2, %67, %cst_18 {dimension_numbers = #tpu.dot_dimension_numbers<[1], [0], [0], [1], [0, 0, 1, 1], [], []>} : vector<8x32xf32>, vector<32x256xf32>, vector<8x256xf32> -> vector<8x256xf32>
    %69 = arith.addf %4, %68 : vector<8x256xf32>
    %cst_19 = arith.constant 2.500000e+00 : f32
    %70 = vector.broadcast %cst_19 : f32 to vector<2x256xf32>
    %71 = arith.mulf %0, %70 : vector<2x256xf32>
    %72 = math.floor %71 : vector<2x256xf32>
    %73 = arith.subf %71, %72 : vector<2x256xf32>
    %74 = arith.fptosi %72 : vector<2x256xf32> to vector<2x256xi32>
    %c7_i32_20 = arith.constant 7 : i32
    %75 = vector.broadcast %c7_i32_20 : i32 to vector<2x256xi32>
    %76 = arith.andi %74, %75 : vector<2x256xi32>
    %77 = vector.extract_strided_slice %76 {offsets = [0, 0], sizes = [1, 256], strides = [1, 1]} : vector<2x256xi32> to vector<1x256xi32>
    %78 = vector.extract_strided_slice %76 {offsets = [1, 0], sizes = [1, 256], strides = [1, 1]} : vector<2x256xi32> to vector<1x256xi32>
    %c1_i32_21 = arith.constant 1 : i32
    %79 = vector.broadcast %c1_i32_21 : i32 to vector<1x256xi32>
    %80 = arith.addi %77, %79 : vector<1x256xi32>
    %c7_i32_22 = arith.constant 7 : i32
    %81 = vector.broadcast %c7_i32_22 : i32 to vector<1x256xi32>
    %82 = arith.andi %80, %81 : vector<1x256xi32>
    %c1_i32_23 = arith.constant 1 : i32
    %83 = vector.broadcast %c1_i32_23 : i32 to vector<1x256xi32>
    %84 = arith.addi %78, %83 : vector<1x256xi32>
    %c7_i32_24 = arith.constant 7 : i32
    %85 = vector.broadcast %c7_i32_24 : i32 to vector<1x256xi32>
    %86 = arith.andi %84, %85 : vector<1x256xi32>
    %87 = arith.mulf %73, %73 : vector<2x256xf32>
    %cst_25 = arith.constant 2.000000e+00 : f32
    %88 = vector.broadcast %cst_25 : f32 to vector<2x256xf32>
    %89 = arith.mulf %88, %73 : vector<2x256xf32>
    %cst_26 = arith.constant 3.000000e+00 : f32
    %90 = vector.broadcast %cst_26 : f32 to vector<2x256xf32>
    %91 = arith.subf %90, %89 : vector<2x256xf32>
    %92 = arith.mulf %87, %91 : vector<2x256xf32>
    %93 = vector.extract_strided_slice %92 {offsets = [0, 0], sizes = [1, 256], strides = [1, 1]} : vector<2x256xf32> to vector<1x256xf32>
    %94 = vector.extract_strided_slice %92 {offsets = [1, 0], sizes = [1, 256], strides = [1, 1]} : vector<2x256xf32> to vector<1x256xf32>
    %95 = vector.broadcast %3 : vector<8x1xi32> to vector<8x256xi32>
    %96 = vector.broadcast %78 : vector<1x256xi32> to vector<8x256xi32>
    %97 = arith.cmpi eq, %95, %96 : vector<8x256xi32>
    %cst_27 = arith.constant 1.000000e+00 : f32
    %98 = vector.broadcast %cst_27 : f32 to vector<1x256xf32>
    %99 = arith.subf %98, %94 : vector<1x256xf32>
    %cst_28 = arith.constant 0.000000e+00 : f32
    %100 = vector.shape_cast %99 : vector<1x256xf32> to vector<1x256xf32>
    %101 = vector.broadcast %100 : vector<1x256xf32> to vector<8x256xf32>
    %102 = vector.broadcast %cst_28 : f32 to vector<8x256xf32>
    %103 = arith.select %97, %101, %102 : vector<8x256xi1>, vector<8x256xf32>
    %104 = vector.broadcast %3 : vector<8x1xi32> to vector<8x256xi32>
    %105 = vector.broadcast %86 : vector<1x256xi32> to vector<8x256xi32>
    %106 = arith.cmpi eq, %104, %105 : vector<8x256xi32>
    %cst_29 = arith.constant 0.000000e+00 : f32
    %107 = vector.shape_cast %94 : vector<1x256xf32> to vector<1x256xf32>
    %108 = vector.broadcast %107 : vector<1x256xf32> to vector<8x256xf32>
    %109 = vector.broadcast %cst_29 : f32 to vector<8x256xf32>
    %110 = arith.select %106, %108, %109 : vector<8x256xi1>, vector<8x256xf32>
    %111 = arith.addf %103, %110 : vector<8x256xf32>
    %112 = vector.broadcast %3 : vector<8x1xi32> to vector<8x256xi32>
    %113 = vector.broadcast %77 : vector<1x256xi32> to vector<8x256xi32>
    %114 = arith.cmpi eq, %112, %113 : vector<8x256xi32>
    %cst_30 = arith.constant 1.000000e+00 : f32
    %115 = vector.broadcast %cst_30 : f32 to vector<1x256xf32>
    %116 = arith.subf %115, %93 : vector<1x256xf32>
    %cst_31 = arith.constant 0.000000e+00 : f32
    %117 = vector.shape_cast %116 : vector<1x256xf32> to vector<1x256xf32>
    %118 = vector.broadcast %117 : vector<1x256xf32> to vector<8x256xf32>
    %119 = vector.broadcast %cst_31 : f32 to vector<8x256xf32>
    %120 = arith.select %114, %118, %119 : vector<8x256xi1>, vector<8x256xf32>
    %121 = vector.broadcast %3 : vector<8x1xi32> to vector<8x256xi32>
    %122 = vector.broadcast %82 : vector<1x256xi32> to vector<8x256xi32>
    %123 = arith.cmpi eq, %121, %122 : vector<8x256xi32>
    %cst_32 = arith.constant 0.000000e+00 : f32
    %124 = vector.shape_cast %93 : vector<1x256xf32> to vector<1x256xf32>
    %125 = vector.broadcast %124 : vector<1x256xf32> to vector<8x256xf32>
    %126 = vector.broadcast %cst_32 : f32 to vector<8x256xf32>
    %127 = arith.select %123, %125, %126 : vector<8x256xi1>, vector<8x256xf32>
    %128 = arith.addf %120, %127 : vector<8x256xf32>
    %129 = vector.extract_strided_slice %1 {offsets = [32, 0], sizes = [32, 8], strides = [1, 1]} : vector<64x8xf32> to vector<32x8xf32>
    %cst_33 = arith.constant dense<0.000000e+00> : vector<32x256xf32>
    %130 = tpu.matmul %129, %111, %cst_33 {dimension_numbers = #tpu.dot_dimension_numbers<[1], [0], [0], [1], [0, 0, 1, 1], [], []>} : vector<32x8xf32>, vector<8x256xf32>, vector<32x256xf32> -> vector<32x256xf32>
    %131 = tpu.concatenate %128, %128, %128, %128 in 0 : vector<8x256xf32>, vector<8x256xf32>, vector<8x256xf32>, vector<8x256xf32> -> vector<32x256xf32>
    %132 = arith.mulf %130, %131 : vector<32x256xf32>
    %cst_34 = arith.constant dense<0.000000e+00> : vector<8x256xf32>
    %133 = tpu.matmul %2, %132, %cst_34 {dimension_numbers = #tpu.dot_dimension_numbers<[1], [0], [0], [1], [0, 0, 1, 1], [], []>} : vector<8x32xf32>, vector<32x256xf32>, vector<8x256xf32> -> vector<8x256xf32>
    %134 = arith.addf %69, %133 : vector<8x256xf32>
    %c0_35 = arith.constant 0 : index
    %c0_36 = arith.constant 0 : index
    %135 = vector.load %arg4[%c0_35, %c0_36] : memref<8x256xf32, #tpu.memory_space<vmem>>, vector<8x256xf32>
    tpu.vector_store %arg4[%c0_35, %c0_36], %134 {strides = array<i32>} : memref<8x256xf32, #tpu.memory_space<vmem>>, vector<8x256xf32>,
    return
  }
  func.func @transform_0(%arg0: i32) -> (i32, i32) {
    %c0_i32 = arith.constant 0 : i32
    %c0_i32_0 = arith.constant 0 : i32
    return %c0_i32, %arg0 : i32, i32
  }
  func.func @transform_1(%arg0: i32) -> (i32, i32) {
    %c0_i32 = arith.constant 0 : i32
    %c0_i32_0 = arith.constant 0 : i32
    %c0_i32_1 = arith.constant 0 : i32
    return %c0_i32, %c0_i32_0 : i32, i32
  }
  func.func @transform_2(%arg0: i32) -> (i32, i32) {
    %c0_i32 = arith.constant 0 : i32
    %c0_i32_0 = arith.constant 0 : i32
    %c0_i32_1 = arith.constant 0 : i32
    return %c0_i32, %c0_i32_0 : i32, i32
  }
  func.func @transform_3(%arg0: i32) -> (i32, i32) {
    %c0_i32 = arith.constant 0 : i32
    %c0_i32_0 = arith.constant 0 : i32
    return %c0_i32, %arg0 : i32, i32
  }
}

</mosaic_0001>

<llo_original>
// kernel: tpu_custom_call.1
$region0: #{tpu_custom_call.1}
  #allocation0 [shape = 'u32[]', space=smem, size = 0x4, offset = 0x4, fixed_abs, tag = 'smem constant byte address 0x4 - core index']
  #allocation1 [shape = 'u32[144,128]{1,0:T(1,128)}', space=vmem, size = 0x12000, scoped, tag = 'internal scratch']
  %s0 = inlined_call_operand.vmem [shape: f32[2,1024], index: 0, kind: input, shape index: {}]
  %s1 = inlined_call_operand.vmem [shape: f32[64,8], index: 1, kind: input, shape index: {}]
  %s2 = inlined_call_operand.vmem [shape: f32[8,32], index: 2, kind: input, shape index: {}]
  %s3 = inlined_call_operand.hbm [shape: f32[8,1024], index: 3, kind: output, shape index: {}]
  %s4 = sld [smem:[#allocation0]]
  $region45: #{tpu_custom_call.1} parent=0
    _
  %s6 = ssub.s32 1, %s4
  %s7 = scalar_select 0, %s6, %s4
  $region1: #{tpu_custom_call.1} parent=0
    #allocation2 [shape = 'u8[16384]{0}', space=vmem, size = 0x4000, scoped, tag = 'output window, operand 0']
    #allocation3 [shape = 's32[2]{0}', space=sflag, size = 0x8, scoped, tag = 'scoped memory for tpu_custom_call.1']
    %8 = vsyncpa [#allocation3], 0
    %s9 = scalar_lea.sflag [#allocation3], 1
    %10 = vsyncpa %s9, 0
    loop: start=0, step=1, limit=6
    $region2: #{tpu_custom_call.1} parent=1 // loop_pre_header
      _
    $region3: #{tpu_custom_call.1} parent=1 // loop_header
      %s12 = sphi 0, %s16
      %p13 = scmp.ge.s32.totalorder %s12, 6
      %s22 = sphi 0, %s24
      %s25 = sphi 0, %s22
      %s26 = sphi 0, %s25
      %s42 = sphi 0, %s26
      %s46 = sphi 0, %s46
      %s48 = sphi 0, %s46
      %s49 = sphi 0, %s48
      %s63 = sphi 0, %s49
      %s67 = sphi 0, %s67
      %s69 = sphi 0, %s67
      %s70 = sphi 0, %s69
      %s84 = sphi 0, %s70
      %s90 = sphi 0, %s92
      %s93 = sphi 0, %s90
      %s94 = sphi 0, %s93
      %s110 = sphi 0, %s94
    $region4: #{tpu_custom_call.1} parent=1 // loop_header_branch
      %15 = sbr.rel (%p13) target = $region8
    $region5: #{tpu_custom_call.1} parent=1 // loop_body
      %s17 = ssub.s32 %s12, 1
      %s18 = ssub.s32 %s12, 2
      %s19 = sadd.s32 %s12, 1
      %s20 = ssub.s32 %s12, %s19
      %p21 = scmp.eq.s32.totalorder %s20, 0
      %s23 = sadd.s32 %s22, 1
      %s24 = scalar_select %p21, %s22, %s23
      %p27 = pneg %p21
      %p28 = scmp.eq.s32.totalorder %s12, 3
      %p29 = por %p27, %p28
      %p30 = scmp.ne.s32.totalorder %s22, %s25
      %p31 = scmp.eq.s32.totalorder %s12, 0
      %p32 = por %p30, %p31
      %p33 = scmp.ne.s32.totalorder %s22, %s25
      %p34 = scmp.eq.s32.totalorder %s17, 3
      %p35 = por %p33, %p34
      %p36 = scmp.ne.s32.totalorder %s25, %s26
      %p37 = scmp.eq.s32.totalorder %s17, 0
      %p38 = por %p36, %p37
      %p39 = scmp.ne.s32.totalorder %s25, %s26
      %p40 = scmp.eq.s32.totalorder %s18, 3
      %p41 = por %p39, %p40
      %p43 = scmp.ne.s32.totalorder %s26, %s42
      %p44 = scmp.eq.s32.totalorder %s18, 0
      %p45 = por %p43, %p44
      %s47 = sadd.s32 %s46, 1
      %p50 = scmp.eq.s32.totalorder %s12, 3
      %p51 = scmp.ne.s32.totalorder %s46, %s48
      %p52 = scmp.eq.s32.totalorder %s12, 0
      %p53 = por %p51, %p52
      %p54 = scmp.ne.s32.totalorder %s46, %s48
      %p55 = scmp.eq.s32.totalorder %s17, 3
      %p56 = por %p54, %p55
      %p57 = scmp.ne.s32.totalorder %s48, %s49
      %p58 = scmp.eq.s32.totalorder %s17, 0
      %p59 = por %p57, %p58
      %p60 = scmp.ne.s32.totalorder %s48, %s49
      %p61 = scmp.eq.s32.totalorder %s18, 3
      %p62 = por %p60, %p61
      %p64 = scmp.ne.s32.totalorder %s49, %s63
      %p65 = scmp.eq.s32.totalorder %s18, 0
      %p66 = por %p64, %p65
      %s68 = sadd.s32 %s67, 1
      %p71 = scmp.eq.s32.totalorder %s12, 3
      %p72 = scmp.ne.s32.totalorder %s67, %s69
      %p73 = scmp.eq.s32.totalorder %s12, 0
      %p74 = por %p72, %p73
      %p75 = scmp.ne.s32.totalorder %s67, %s69
      %p76 = scmp.eq.s32.totalorder %s17, 3
      %p77 = por %p75, %p76
      %p78 = scmp.ne.s32.totalorder %s69, %s70
      %p79 = scmp.eq.s32.totalorder %s17, 0
      %p80 = por %p78, %p79
      %p81 = scmp.ne.s32.totalorder %s69, %s70
      %p82 = scmp.eq.s32.totalorder %s18, 3
      %p83 = por %p81, %p82
      %p85 = scmp.ne.s32.totalorder %s70, %s84
      %p86 = scmp.eq.s32.totalorder %s18, 0
      %p87 = por %p85, %p86
      %s88 = ssub.s32 %s12, %s19
      %p89 = scmp.eq.s32.totalorder %s88, 0
      %s91 = sadd.s32 %s90, 1
      %s92 = scalar_select %p89, %s90, %s91
      %p95 = pneg %p89
      %p96 = scmp.eq.s32.totalorder %s12, 3
      %p97 = por %p95, %p96
      %p98 = scmp.ne.s32.totalorder %s90, %s93
      %p99 = scmp.eq.s32.totalorder %s12, 0
      %p100 = por %p98, %p99
      %p101 = scmp.ne.s32.totalorder %s90, %s93
      %p102 = scmp.eq.s32.totalorder %s17, 3
      %p103 = por %p101, %p102
      %p104 = scmp.ne.s32.totalorder %s93, %s94
      %p105 = scmp.eq.s32.totalorder %s17, 0
      %p106 = por %p104, %p105
      %p107 = scmp.ne.s32.totalorder %s93, %s94
      %p108 = scmp.eq.s32.totalorder %s18, 3
      %p109 = por %p107, %p108
      %p111 = scmp.ne.s32.totalorder %s94, %s110
      %p112 = scmp.eq.s32.totalorder %s18, 0
      %p113 = por %p111, %p112
      %p114 = scmp.le.s32.totalorder 1, %s12
      %p115 = scmp.lt.s32.totalorder %s12, 5
      %p116 = pnand %p114, %p115
      %p117 = pneg %p116
      // Predicated region
      $region9: #{tpu_custom_call.1} parent=5 // pred_check
        _
      $region10: #{tpu_custom_call.1} parent=5 // pred_check_branch
        %119 = sbr.rel (%p116) target = $region12
      $region11: #{tpu_custom_call.1} parent=5 // pred_region
        %s120 = ssub.s32 %s12, 1
        // Predicated region
        $region13: #{tpu_custom_call.1} parent=11 // pred_check
          %p121 = pneg %p59
        $region14: #{tpu_custom_call.1} parent=11 // pred_check_branch
          %123 = sbr.rel (%p121) target = $region16
        $region15: #{tpu_custom_call.1} parent=11 // pred_region
          _
        $region16: #{tpu_custom_call.1} parent=11 // pred_fallthru
          _
        // Predicated region
        $region17: #{tpu_custom_call.1} parent=11 // pred_check
          %p124 = pneg %p80
        $region18: #{tpu_custom_call.1} parent=11 // pred_check_branch
          %126 = sbr.rel (%p124) target = $region20
        $region19: #{tpu_custom_call.1} parent=11 // pred_region
          _
        $region20: #{tpu_custom_call.1} parent=11 // pred_fallthru
          _
      $region12: #{tpu_custom_call.1} parent=5 // pred_fallthru
        _
      %p127 = scmp.lt.s32.totalorder %s12, 4
      // Predicated region
      $region21: #{tpu_custom_call.1} parent=5 // pred_check
        %p128 = pneg %p127
      $region22: #{tpu_custom_call.1} parent=5 // pred_check_branch
        %130 = sbr.rel (%p128) target = $region24
      $region23: #{tpu_custom_call.1} parent=5 // pred_region
        // Predicated region
        $region25: #{tpu_custom_call.1} parent=23 // pred_check
          %p131 = pneg %p32
        $region26: #{tpu_custom_call.1} parent=23 // pred_check_branch
          %133 = sbr.rel (%p131) target = $region28
        $region27: #{tpu_custom_call.1} parent=23 // pred_region
          %s134 = smul.u32 2, %s12
          %p135 = scmp.lt.s32.totalorder %s134, 7
          %s136 = scalar_select %p135, %s134, 7
          %s137 = smul.addr %s136, 2
          %s138 = scalar_lea.vmem %s0, %s137
          %s139 = smul.u32 2, %s12
        $region28: #{tpu_custom_call.1} parent=23 // pred_fallthru
          _
      $region24: #{tpu_custom_call.1} parent=5 // pred_fallthru
        _
      %p140 = scmp.le.s32.totalorder 1, %s12
      %p141 = scmp.lt.s32.totalorder %s12, 5
      %p142 = pnand %p140, %p141
      %p143 = pneg %p142
      // Predicated region
      $region29: #{tpu_custom_call.1} parent=5 // pred_check
        _
      $region30: #{tpu_custom_call.1} parent=5 // pred_check_branch
        %145 = sbr.rel (%p142) target = $region32
      $region31: #{tpu_custom_call.1} parent=5 // pred_region
        %s146 = ssub.s32 %s12, 1
        %s147 = smul.u32 2, %s17
        %p148 = scmp.lt.s32.totalorder %s147, 7
        %s149 = scalar_select %p148, %s147, 7
        %s150 = smul.addr %s149, 2
        %s151 = scalar_lea.vmem %s0, %s150
        %p152 = pneg %p38
        %p153 = pneg %p35
        %p154 = pneg %p59
        %p155 = pneg %p56
        %p156 = pneg %p80
        %p157 = pneg %p77
        %p158 = pneg %p106
        %p159 = pneg %p103
        %s160 = sand.u32 %s93, 1
        %s161 = scalar_lea.sflag [#allocation3], %s160
        %s162 = sand.u32 %s93, 1
        %s163 = smul.addr %s162, 16
        %s164 = scalar_lea.vmem [#allocation2], %s163
        %s165 = smul.u32 2, %s17
        %p166 = scmp.lt.s32.totalorder %s165, 7
        %s167 = scalar_select %p166, %s165, 7
        %s168 = smul.addr %s167, 2
        %s169 = scalar_lea.vmem %s0, %s168
        %s170 = smul.u32 2, %s17
        %s171 = smul.u32 2, %s17
        %v172 = vld [vmem:[%s169] sm:$0xf]
        %v173 = vld [vmem:[%s1] sm:$0xff]
        %v174 = vld [vmem:[%s1 + $0x8] sm:$0xff]
        %v175 = vld [vmem:[%s1 + $0x10] sm:$0xff]
        %v176 = vld [vmem:[%s1 + $0x18] sm:$0xff]
        %v177 = vld [vmem:[%s1 + $0x20] sm:$0xff]
        %v178 = vld [vmem:[%s1 + $0x28] sm:$0xff]
        %v179 = vld [vmem:[%s1 + $0x30] sm:$0xff]
        %v180 = vld [vmem:[%s1 + $0x38] sm:$0xff]
        %v181 = vld [vmem:[%s2] sm:$0xff]
        %v182 = vlaneseq
        %v183 = vshrl.u32 %v182, 7
        %v184 = vfloor.f32 %v172
        %v185 = vsub.f32 %v172, %v184
        %v186 = vcvt.f32.s32.to.zero.pseudo %v184
        %v187 = vand.u32 %v186, 7
        %v188 = vadd.s32 %v187, 1
        %v189 = vand.u32 %v188, 7
        %v190 = vmul.f32 %v185, %v185
        %v191 = vmul.f32 %v185, 2.0
        %v192 = vsub.f32 3.0, %v191
        %v193 = vmul.f32 %v190, %v192
        %v194 = vlaneseq
        %v195 = vshrl.u32 %v194, 7
        %v196 = vsub.s32 1, %v195
        %v197 = vrot.slane %v187, %v196
        %v198 = vlaneseq
        %v199 = vshrl.u32 %v198, 7
        %v200 = vsub.s32 3, %v199
        %v201 = vrot.slane %v187, %v200
        %v202 = vlaneseq
        %v203 = vshrl.u32 %v202, 7
        %v204 = vsub.s32 1, %v203
        %v205 = vrot.slane %v197, %v204
        %v206 = vlaneseq
        %v207 = vshrl.u32 %v206, 7
        %v208 = vsub.s32 1, %v207
        %v209 = vrot.slane %v201, %v208
        %vm210 = vcmp.eq.s32.totalorder %v183, %v205
        %vm211 = vcmp.eq.s32.totalorder %v183, %v209
        %v212 = vsub.f32 1.0, %v193
        %v214 = vlaneseq
        %v215 = vshrl.u32 %v214, 7
        %v216 = vsub.s32 1, %v215
        %v217 = vrot.slane %v212, %v216
        %v218 = vlaneseq
        %v219 = vshrl.u32 %v218, 7
        %v220 = vsub.s32 3, %v219
        %v221 = vrot.slane %v212, %v220
        %v224 = vlaneseq
        %v225 = vshrl.u32 %v224, 7
        %v226 = vsub.s32 1, %v225
        %v227 = vrot.slane %v217, %v226
        %v228 = vlaneseq
        %v229 = vshrl.u32 %v228, 7
        %v230 = vsub.s32 1, %v229
        %v231 = vrot.slane %v221, %v230
        %v232 = vsel %vm210, %v227, 0.0
        %v233 = vsel %vm211, %v231, 0.0
        %v234 = vlaneseq
        %v235 = vshrl.u32 %v234, 7
        %v236 = vsub.s32 1, %v235
        %v237 = vrot.slane %v189, %v236
        %v238 = vlaneseq
        %v239 = vshrl.u32 %v238, 7
        %v240 = vsub.s32 3, %v239
        %v241 = vrot.slane %v189, %v240
        %v242 = vlaneseq
        %v243 = vshrl.u32 %v242, 7
        %v244 = vsub.s32 1, %v243
        %v245 = vrot.slane %v237, %v244
        %v246 = vlaneseq
        %v247 = vshrl.u32 %v246, 7
        %v248 = vsub.s32 1, %v247
        %v249 = vrot.slane %v241, %v248
        %vm250 = vcmp.eq.s32.totalorder %v183, %v245
        %vm251 = vcmp.eq.s32.totalorder %v183, %v249
        %v253 = vlaneseq
        %v254 = vshrl.u32 %v253, 7
        %v255 = vsub.s32 1, %v254
        %v256 = vrot.slane %v193, %v255
        %v257 = vlaneseq
        %v258 = vshrl.u32 %v257, 7
        %v259 = vsub.s32 3, %v258
        %v260 = vrot.slane %v193, %v259
        %v263 = vlaneseq
        %v264 = vshrl.u32 %v263, 7
        %v265 = vsub.s32 1, %v264
        %v266 = vrot.slane %v256, %v265
        %v267 = vlaneseq
        %v268 = vshrl.u32 %v267, 7
        %v269 = vsub.s32 1, %v268
        %v270 = vrot.slane %v260, %v269
        %v271 = vsel %vm250, %v266, 0.0
        %v272 = vsel %vm251, %v270, 0.0
        %v273 = vadd.f32 %v232, %v271
        %v274 = vadd.f32 %v233, %v272
        %v275 = vlaneseq
        %v276 = vshrl.u32 %v275, 7
        %v277 = vsub.s32 0, %v276
        %v278 = vrot.slane %v187, %v277
        %v279 = vlaneseq
        %v280 = vshrl.u32 %v279, 7
        %v281 = vsub.s32 2, %v280
        %v282 = vrot.slane %v187, %v281
        %v283 = vlaneseq
        %v284 = vshrl.u32 %v283, 7
        %v285 = vsub.s32 0, %v284
        %v286 = vrot.slane %v278, %v285
        %v287 = vlaneseq
        %v288 = vshrl.u32 %v287, 7
        %v289 = vsub.s32 0, %v288
        %v290 = vrot.slane %v282, %v289
        %vm291 = vcmp.eq.s32.totalorder %v183, %v286
        %vm292 = vcmp.eq.s32.totalorder %v183, %v290
        %v293 = vlaneseq
        %v294 = vshrl.u32 %v293, 7
        %v295 = vsub.s32 0, %v294
        %v296 = vrot.slane %v212, %v295
        %v297 = vlaneseq
        %v298 = vshrl.u32 %v297, 7
        %v299 = vsub.s32 2, %v298
        %v300 = vrot.slane %v212, %v299
        %v303 = vlaneseq
        %v304 = vshrl.u32 %v303, 7
        %v305 = vsub.s32 0, %v304
        %v306 = vrot.slane %v296, %v305
        %v307 = vlaneseq
        %v308 = vshrl.u32 %v307, 7
        %v309 = vsub.s32 0, %v308
        %v310 = vrot.slane %v300, %v309
        %v311 = vsel %vm291, %v306, 0.0
        %v312 = vsel %vm292, %v310, 0.0
        %v313 = vlaneseq
        %v314 = vshrl.u32 %v313, 7
        %v315 = vsub.s32 0, %v314
        %v316 = vrot.slane %v189, %v315
        %v317 = vlaneseq
        %v318 = vshrl.u32 %v317, 7
        %v319 = vsub.s32 2, %v318
        %v320 = vrot.slane %v189, %v319
        %v321 = vlaneseq
        %v322 = vshrl.u32 %v321, 7
        %v323 = vsub.s32 0, %v322
        %v324 = vrot.slane %v316, %v323
        %v325 = vlaneseq
        %v326 = vshrl.u32 %v325, 7
        %v327 = vsub.s32 0, %v326
        %v328 = vrot.slane %v320, %v327
        %vm329 = vcmp.eq.s32.totalorder %v183, %v324
        %vm330 = vcmp.eq.s32.totalorder %v183, %v328
        %v331 = vlaneseq
        %v332 = vshrl.u32 %v331, 7
        %v333 = vsub.s32 0, %v332
        %v334 = vrot.slane %v193, %v333
        %v335 = vlaneseq
        %v336 = vshrl.u32 %v335, 7
        %v337 = vsub.s32 2, %v336
        %v338 = vrot.slane %v193, %v337
        %v341 = vlaneseq
        %v342 = vshrl.u32 %v341, 7
        %v343 = vsub.s32 0, %v342
        %v344 = vrot.slane %v334, %v343
        %v345 = vlaneseq
        %v346 = vshrl.u32 %v345, 7
        %v347 = vsub.s32 0, %v346
        %v348 = vrot.slane %v338, %v347
        %v349 = vsel %vm329, %v344, 0.0
        %v350 = vsel %vm330, %v348, 0.0
        %v351 = vadd.f32 %v311, %v349
        %v352 = vadd.f32 %v312, %v350
        %vm353 = vcmask 64512
        %v355 = vsel %vm353, %v173, 0
        %v358 = vsel %vm353, %v174, 0
        %v361 = vsel %vm353, %v175, 0
        %v364 = vsel %vm353, %v176, 0
        %366 = vmatprep.subr.mxu0 %v274
        %367 = vmatpush1.msra.mxu0 %v273
        %368 = vmatprep.subr.mxu0 0.0
        %369 = vmatpush1.msra.mxu0 0.0
        %370 = vmatprep.subr.mxu0 0.0
        %371 = vmatpush1.msra.mxu0 0.0
        %372 = vmatprep.subr.mxu0 0.0
        %373 = vmatpush1.msra.mxu0 0.0
        %374 = vmatprep.subr.mxu0 0.0
        %375 = vmatpush1.msra.mxu0 0.0
        %376 = vmatprep.subr.mxu0 0.0
        %377 = vmatpush1.msra.mxu0 0.0
        %378 = vmatprep.subr.mxu0 0.0
        %379 = vmatpush1.msra.mxu0 0.0
        %380 = vmatprep.subr.mxu0 0.0
        %381 = vmatpush1.msra.mxu0 0.0
        %382 = vmatprep.subr.mxu0 0.0
        %383 = vmatpush1.msra.mxu0 0.0
        %384 = vmatprep.subr.mxu0 0.0
        %385 = vmatpush1.msra.mxu0 0.0
        %386 = vmatprep.subr.mxu0 0.0
        %387 = vmatpush1.msra.mxu0 0.0
        %388 = vmatprep.subr.mxu0 0.0
        %389 = vmatpush1.msra.mxu0 0.0
        %390 = vmatprep.subr.mxu0 0.0
        %391 = vmatpush1.msra.mxu0 0.0
        %392 = vmatprep.subr.mxu0 0.0
        %393 = vmatpush1.msra.mxu0 0.0
        %394 = vmatprep.subr.mxu0 0.0
        %395 = vmatpush1.msra.mxu0 0.0
        %396 = vmatprep.subr.mxu0 0.0
        %397 = vmatpush1.msra.mxu0 0.0
        %398 = vmatprep.subr.mxu0 0.0
        %399 = vmatpush1.msra.mxu0 0.0
        %400 = vmatprep.subr.mxu0 0.0
        %401 = vmatpush1.msra.mxu0 0.0
        %402 = vmatprep.subr.mxu0 0.0
        %403 = vmatpush1.msra.mxu0 0.0
        %404 = vmatprep.subr.mxu0 0.0
        %405 = vmatpush1.msra.mxu0 0.0
        %406 = vmatprep.subr.mxu0 0.0
        %407 = vmatpush1.msra.mxu0 0.0
        %408 = vmatprep.subr.mxu0 0.0
        %409 = vmatpush1.msra.mxu0 0.0
        %410 = vmatprep.subr.mxu0 0.0
        %411 = vmatpush1.msra.mxu0 0.0
        %412 = vmatprep.subr.mxu0 0.0
        %413 = vmatpush1.msra.mxu0 0.0
        %414 = vmatprep.subr.mxu0 0.0
        %415 = vmatpush1.msra.mxu0 0.0
        %416 = vmatprep.subr.mxu0 0.0
        %417 = vmatpush1.msra.mxu0 0.0
        %418 = vmatprep.subr.mxu0 0.0
        %419 = vmatpush1.msra.mxu0 0.0
        %420 = vmatprep.subr.mxu0 0.0
        %421 = vmatpush1.msra.mxu0 0.0
        %422 = vmatprep.subr.mxu0 0.0
        %423 = vmatpush1.msra.mxu0 0.0
        %424 = vmatprep.subr.mxu0 0.0
        %425 = vmatpush1.msra.mxu0 0.0
        %426 = vmatprep.subr.mxu0 0.0
        %427 = vmatpush1.msra.mxu0 0.0
        %428 = vmatprep.subr.mxu0 0.0
        %429 = vmatpush1.msra.mxu0 0.0
        %430 = vmatprep.mubr.f32.mxu0 0.0
        %431 = vmatmul.mubr.f32.gmra.mrb[0].mxu0 %v355
        %v432 = vpop.f32.mrb[0].mxu0
        %v433 = vadd.f32 0.0, %v432
        %v434 = vpop.f32.mrb[0].mxu0
        %v435 = vadd.f32 0.0, %v434
        %436 = vmatprep.mubr.f32.mxu0 0.0
        %437 = vmatmul.mubr.f32.gmra.mrb[0].mxu0 %v358
        %v438 = vpop.f32.mrb[0].mxu0
        %v439 = vadd.f32 0.0, %v438
        %v440 = vpop.f32.mrb[0].mxu0
        %v441 = vadd.f32 0.0, %v440
        %442 = vmatprep.mubr.f32.mxu0 0.0
        %443 = vmatmul.mubr.f32.gmra.mrb[0].mxu0 %v361
        %v444 = vpop.f32.mrb[0].mxu0
        %v445 = vadd.f32 0.0, %v444
        %v446 = vpop.f32.mrb[0].mxu0
        %v447 = vadd.f32 0.0, %v446
        %448 = vmatprep.mubr.f32.mxu0 0.0
        %449 = vmatmul.mubr.f32.gmra.mrb[0].mxu0 %v364
        %v450 = vpop.f32.mrb[0].mxu0
        %v451 = vadd.f32 0.0, %v450
        %v452 = vpop.f32.mrb[0].mxu0
        %v453 = vadd.f32 0.0, %v452
        %454 = vdwg.mxu0
        %v455 = vmul.f32 %v433, %v351
        %v456 = vmul.f32 %v435, %v352
        %v457 = vmul.f32 %v439, %v351
        %v458 = vmul.f32 %v441, %v352
        %v459 = vmul.f32 %v445, %v351
        %v460 = vmul.f32 %v447, %v352
        %v461 = vmul.f32 %v451, %v351
        %v462 = vmul.f32 %v453, %v352
        %v463 = vmul.f32 %v172, 2.5
        %v464 = vfloor.f32 %v463
        %v465 = vsub.f32 %v463, %v464
        %v466 = vcvt.f32.s32.to.zero.pseudo %v464
        %v467 = vand.u32 %v466, 7
        %v468 = vadd.s32 %v467, 1
        %v469 = vand.u32 %v468, 7
        %v470 = vmul.f32 %v465, %v465
        %v471 = vmul.f32 %v465, 2.0
        %v472 = vsub.f32 3.0, %v471
        %v473 = vmul.f32 %v470, %v472
        %v474 = vlaneseq
        %v475 = vshrl.u32 %v474, 7
        %v476 = vsub.s32 1, %v475
        %v477 = vrot.slane %v467, %v476
        %v478 = vlaneseq
        %v479 = vshrl.u32 %v478, 7
        %v480 = vsub.s32 3, %v479
        %v481 = vrot.slane %v467, %v480
        %v482 = vlaneseq
        %v483 = vshrl.u32 %v482, 7
        %v484 = vsub.s32 1, %v483
        %v485 = vrot.slane %v477, %v484
        %v486 = vlaneseq
        %v487 = vshrl.u32 %v486, 7
        %v488 = vsub.s32 1, %v487
        %v489 = vrot.slane %v481, %v488
        %vm490 = vcmp.eq.s32.totalorder %v183, %v485
        %vm491 = vcmp.eq.s32.totalorder %v183, %v489
        %v492 = vsub.f32 1.0, %v473
        %v494 = vlaneseq
        %v495 = vshrl.u32 %v494, 7
        %v496 = vsub.s32 1, %v495
        %v497 = vrot.slane %v492, %v496
        %v498 = vlaneseq
        %v499 = vshrl.u32 %v498, 7
        %v500 = vsub.s32 3, %v499
        %v501 = vrot.slane %v492, %v500
        %v504 = vlaneseq
        %v505 = vshrl.u32 %v504, 7
        %v506 = vsub.s32 1, %v505
        %v507 = vrot.slane %v497, %v506
        %v508 = vlaneseq
        %v509 = vshrl.u32 %v508, 7
        %v510 = vsub.s32 1, %v509
        %v511 = vrot.slane %v501, %v510
        %v512 = vsel %vm490, %v507, 0.0
        %v513 = vsel %vm491, %v511, 0.0
        %v514 = vlaneseq
        %v515 = vshrl.u32 %v514, 7
        %v516 = vsub.s32 1, %v515
        %v517 = vrot.slane %v469, %v516
        %v518 = vlaneseq
        %v519 = vshrl.u32 %v518, 7
        %v520 = vsub.s32 3, %v519
        %v521 = vrot.slane %v469, %v520
        %v522 = vlaneseq
        %v523 = vshrl.u32 %v522, 7
        %v524 = vsub.s32 1, %v523
        %v525 = vrot.slane %v517, %v524
        %v526 = vlaneseq
        %v527 = vshrl.u32 %v526, 7
        %v528 = vsub.s32 1, %v527
        %v529 = vrot.slane %v521, %v528
        %vm530 = vcmp.eq.s32.totalorder %v183, %v525
        %vm531 = vcmp.eq.s32.totalorder %v183, %v529
        %v533 = vlaneseq
        %v534 = vshrl.u32 %v533, 7
        %v535 = vsub.s32 1, %v534
        %v536 = vrot.slane %v473, %v535
        %v537 = vlaneseq
        %v538 = vshrl.u32 %v537, 7
        %v539 = vsub.s32 3, %v538
        %v540 = vrot.slane %v473, %v539
        %v543 = vlaneseq
        %v544 = vshrl.u32 %v543, 7
        %v545 = vsub.s32 1, %v544
        %v546 = vrot.slane %v536, %v545
        %v547 = vlaneseq
        %v548 = vshrl.u32 %v547, 7
        %v549 = vsub.s32 1, %v548
        %v550 = vrot.slane %v540, %v549
        %v551 = vsel %vm530, %v546, 0.0
        %v552 = vsel %vm531, %v550, 0.0
        %v553 = vadd.f32 %v512, %v551
        %v554 = vadd.f32 %v513, %v552
        %v555 = vlaneseq
        %v556 = vshrl.u32 %v555, 7
        %v557 = vsub.s32 0, %v556
        %v558 = vrot.slane %v467, %v557
        %v559 = vlaneseq
        %v560 = vshrl.u32 %v559, 7
        %v561 = vsub.s32 2, %v560
        %v562 = vrot.slane %v467, %v561
        %v563 = vlaneseq
        %v564 = vshrl.u32 %v563, 7
        %v565 = vsub.s32 0, %v564
        %v566 = vrot.slane %v558, %v565
        %v567 = vlaneseq
        %v568 = vshrl.u32 %v567, 7
        %v569 = vsub.s32 0, %v568
        %v570 = vrot.slane %v562, %v569
        %vm571 = vcmp.eq.s32.totalorder %v183, %v566
        %vm572 = vcmp.eq.s32.totalorder %v183, %v570
        %v573 = vlaneseq
        %v574 = vshrl.u32 %v573, 7
        %v575 = vsub.s32 0, %v574
        %v576 = vrot.slane %v492, %v575
        %v577 = vlaneseq
        %v578 = vshrl.u32 %v577, 7
        %v579 = vsub.s32 2, %v578
        %v580 = vrot.slane %v492, %v579
        %v583 = vlaneseq
        %v584 = vshrl.u32 %v583, 7
        %v585 = vsub.s32 0, %v584
        %v586 = vrot.slane %v576, %v585
        %v587 = vlaneseq
        %v588 = vshrl.u32 %v587, 7
        %v589 = vsub.s32 0, %v588
        %v590 = vrot.slane %v580, %v589
        %v591 = vsel %vm571, %v586, 0.0
        %v592 = vsel %vm572, %v590, 0.0
        %v593 = vlaneseq
        %v594 = vshrl.u32 %v593, 7
        %v595 = vsub.s32 0, %v594
        %v596 = vrot.slane %v469, %v595
        %v597 = vlaneseq
        %v598 = vshrl.u32 %v597, 7
        %v599 = vsub.s32 2, %v598
        %v600 = vrot.slane %v469, %v599
        %v601 = vlaneseq
        %v602 = vshrl.u32 %v601, 7
        %v603 = vsub.s32 0, %v602
        %v604 = vrot.slane %v596, %v603
        %v605 = vlaneseq
        %v606 = vshrl.u32 %v605, 7
        %v607 = vsub.s32 0, %v606
        %v608 = vrot.slane %v600, %v607
        %vm609 = vcmp.eq.s32.totalorder %v183, %v604
        %vm610 = vcmp.eq.s32.totalorder %v183, %v608
        %v611 = vlaneseq
        %v612 = vshrl.u32 %v611, 7
        %v613 = vsub.s32 0, %v612
        %v614 = vrot.slane %v473, %v613
        %v615 = vlaneseq
        %v616 = vshrl.u32 %v615, 7
        %v617 = vsub.s32 2, %v616
        %v618 = vrot.slane %v473, %v617
        %v621 = vlaneseq
        %v622 = vshrl.u32 %v621, 7
        %v623 = vsub.s32 0, %v622
        %v624 = vrot.slane %v614, %v623
        %v625 = vlaneseq
        %v626 = vshrl.u32 %v625, 7
        %v627 = vsub.s32 0, %v626
        %v628 = vrot.slane %v618, %v627
        %v629 = vsel %vm609, %v624, 0.0
        %v630 = vsel %vm610, %v628, 0.0
        %v631 = vadd.f32 %v591, %v629
        %v632 = vadd.f32 %v592, %v630
        %v634 = vsel %vm353, %v177, 0
        %v637 = vsel %vm353, %v178, 0
        %v640 = vsel %vm353, %v179, 0
        %v643 = vsel %vm353, %v180, 0
        %645 = vmatprep.subr.mxu0 %v554
        %646 = vmatpush1.msra.mxu0 %v553
        %647 = vmatprep.subr.mxu0 0.0
        %648 = vmatpush1.msra.mxu0 0.0
        %649 = vmatprep.subr.mxu0 0.0
        %650 = vmatpush1.msra.mxu0 0.0
        %651 = vmatprep.subr.mxu0 0.0
        %652 = vmatpush1.msra.mxu0 0.0
        %653 = vmatprep.subr.mxu0 0.0
        %654 = vmatpush1.msra.mxu0 0.0
        %655 = vmatprep.subr.mxu0 0.0
        %656 = vmatpush1.msra.mxu0 0.0
        %657 = vmatprep.subr.mxu0 0.0
        %658 = vmatpush1.msra.mxu0 0.0
        %659 = vmatprep.subr.mxu0 0.0
        %660 = vmatpush1.msra.mxu0 0.0
        %661 = vmatprep.subr.mxu0 0.0
        %662 = vmatpush1.msra.mxu0 0.0
        %663 = vmatprep.subr.mxu0 0.0
        %664 = vmatpush1.msra.mxu0 0.0
        %665 = vmatprep.subr.mxu0 0.0
        %666 = vmatpush1.msra.mxu0 0.0
        %667 = vmatprep.subr.mxu0 0.0
        %668 = vmatpush1.msra.mxu0 0.0
        %669 = vmatprep.subr.mxu0 0.0
        %670 = vmatpush1.msra.mxu0 0.0
        %671 = vmatprep.subr.mxu0 0.0
        %672 = vmatpush1.msra.mxu0 0.0
        %673 = vmatprep.subr.mxu0 0.0
        %674 = vmatpush1.msra.mxu0 0.0
        %675 = vmatprep.subr.mxu0 0.0
        %676 = vmatpush1.msra.mxu0 0.0
        %677 = vmatprep.subr.mxu0 0.0
        %678 = vmatpush1.msra.mxu0 0.0
        %679 = vmatprep.subr.mxu0 0.0
        %680 = vmatpush1.msra.mxu0 0.0
        %681 = vmatprep.subr.mxu0 0.0
        %682 = vmatpush1.msra.mxu0 0.0
        %683 = vmatprep.subr.mxu0 0.0
        %684 = vmatpush1.msra.mxu0 0.0
        %685 = vmatprep.subr.mxu0 0.0
        %686 = vmatpush1.msra.mxu0 0.0
        %687 = vmatprep.subr.mxu0 0.0
        %688 = vmatpush1.msra.mxu0 0.0
        %689 = vmatprep.subr.mxu0 0.0
        %690 = vmatpush1.msra.mxu0 0.0
        %691 = vmatprep.subr.mxu0 0.0
        %692 = vmatpush1.msra.mxu0 0.0
        %693 = vmatprep.subr.mxu0 0.0
        %694 = vmatpush1.msra.mxu0 0.0
        %695 = vmatprep.subr.mxu0 0.0
        %696 = vmatpush1.msra.mxu0 0.0
        %697 = vmatprep.subr.mxu0 0.0
        %698 = vmatpush1.msra.mxu0 0.0
        %699 = vmatprep.subr.mxu0 0.0
        %700 = vmatpush1.msra.mxu0 0.0
        %701 = vmatprep.subr.mxu0 0.0
        %702 = vmatpush1.msra.mxu0 0.0
        %703 = vmatprep.subr.mxu0 0.0
        %704 = vmatpush1.msra.mxu0 0.0
        %705 = vmatprep.subr.mxu0 0.0
        %706 = vmatpush1.msra.mxu0 0.0
        %707 = vmatprep.subr.mxu0 0.0
        %708 = vmatpush1.msra.mxu0 0.0
        %709 = vmatprep.mubr.f32.mxu0 0.0
        %710 = vmatmul.mubr.f32.gmra.mrb[0].mxu0 %v634
        %v711 = vpop.f32.mrb[0].mxu0
        %v712 = vadd.f32 0.0, %v711
        %v713 = vpop.f32.mrb[0].mxu0
        %v714 = vadd.f32 0.0, %v713
        %715 = vmatprep.mubr.f32.mxu0 0.0
        %716 = vmatmul.mubr.f32.gmra.mrb[0].mxu0 %v637
        %v717 = vpop.f32.mrb[0].mxu0
        %v718 = vadd.f32 0.0, %v717
        %v719 = vpop.f32.mrb[0].mxu0
        %v720 = vadd.f32 0.0, %v719
        %721 = vmatprep.mubr.f32.mxu0 0.0
        %722 = vmatmul.mubr.f32.gmra.mrb[0].mxu0 %v640
        %v723 = vpop.f32.mrb[0].mxu0
        %v724 = vadd.f32 0.0, %v723
        %v725 = vpop.f32.mrb[0].mxu0
        %v726 = vadd.f32 0.0, %v725
        %727 = vmatprep.mubr.f32.mxu0 0.0
        %728 = vmatmul.mubr.f32.gmra.mrb[0].mxu0 %v643
        %v729 = vpop.f32.mrb[0].mxu0
        %v730 = vadd.f32 0.0, %v729
        %v731 = vpop.f32.mrb[0].mxu0
        %v732 = vadd.f32 0.0, %v731
        %733 = vdwg.mxu0
        %v734 = vmul.f32 %v712, %v631
        %v735 = vmul.f32 %v714, %v632
        %v736 = vmul.f32 %v718, %v631
        %v737 = vmul.f32 %v720, %v632
        %v738 = vmul.f32 %v724, %v631
        %v739 = vmul.f32 %v726, %v632
        %v740 = vmul.f32 %v730, %v631
        %v741 = vmul.f32 %v732, %v632
        %vm742 = vcmask 261120
        %v744 = vsel %vm742, %v181, 0
        %746 = vmatprep.subr.mxu0 %v735
        %747 = vmatpush1.msra.mxu0 %v734
        %748 = vmatprep.subr.mxu0 %v737
        %749 = vmatpush1.msra.mxu0 %v736
        %750 = vmatprep.subr.mxu0 %v739
        %751 = vmatpush1.msra.mxu0 %v738
        %752 = vmatprep.subr.mxu0 %v741
        %753 = vmatpush1.msra.mxu0 %v740
        %754 = vmatprep.subr.mxu0 0.0
        %755 = vmatpush1.msra.mxu0 0.0
        %756 = vmatprep.subr.mxu0 0.0
        %757 = vmatpush1.msra.mxu0 0.0
        %758 = vmatprep.subr.mxu0 0.0
        %759 = vmatpush1.msra.mxu0 0.0
        %760 = vmatprep.subr.mxu0 0.0
        %761 = vmatpush1.msra.mxu0 0.0
        %762 = vmatprep.subr.mxu0 0.0
        %763 = vmatpush1.msra.mxu0 0.0
        %764 = vmatprep.subr.mxu0 0.0
        %765 = vmatpush1.msra.mxu0 0.0
        %766 = vmatprep.subr.mxu0 0.0
        %767 = vmatpush1.msra.mxu0 0.0
        %768 = vmatprep.subr.mxu0 0.0
        %769 = vmatpush1.msra.mxu0 0.0
        %770 = vmatprep.subr.mxu0 0.0
        %771 = vmatpush1.msra.mxu0 0.0
        %772 = vmatprep.subr.mxu0 0.0
        %773 = vmatpush1.msra.mxu0 0.0
        %774 = vmatprep.subr.mxu0 0.0
        %775 = vmatpush1.msra.mxu0 0.0
        %776 = vmatprep.subr.mxu0 0.0
        %777 = vmatpush1.msra.mxu0 0.0
        %778 = vmatprep.subr.mxu0 0.0
        %779 = vmatpush1.msra.mxu0 0.0
        %780 = vmatprep.subr.mxu0 0.0
        %781 = vmatpush1.msra.mxu0 0.0
        %782 = vmatprep.subr.mxu0 0.0
        %783 = vmatpush1.msra.mxu0 0.0
        %784 = vmatprep.subr.mxu0 0.0
        %785 = vmatpush1.msra.mxu0 0.0
        %786 = vmatprep.subr.mxu0 0.0
        %787 = vmatpush1.msra.mxu0 0.0
        %788 = vmatprep.subr.mxu0 0.0
        %789 = vmatpush1.msra.mxu0 0.0
        %790 = vmatprep.subr.mxu0 0.0
        %791 = vmatpush1.msra.mxu0 0.0
        %792 = vmatprep.subr.mxu0 0.0
        %793 = vmatpush1.msra.mxu0 0.0
        %794 = vmatprep.subr.mxu0 0.0
        %795 = vmatpush1.msra.mxu0 0.0
        %796 = vmatprep.subr.mxu0 0.0
        %797 = vmatpush1.msra.mxu0 0.0
        %798 = vmatprep.subr.mxu0 0.0
        %799 = vmatpush1.msra.mxu0 0.0
        %800 = vmatprep.subr.mxu0 0.0
        %801 = vmatpush1.msra.mxu0 0.0
        %802 = vmatprep.subr.mxu0 0.0
        %803 = vmatpush1.msra.mxu0 0.0
        %804 = vmatprep.subr.mxu0 0.0
        %805 = vmatpush1.msra.mxu0 0.0
        %806 = vmatprep.subr.mxu0 0.0
        %807 = vmatpush1.msra.mxu0 0.0
        %808 = vmatprep.subr.mxu0 0.0
        %809 = vmatpush1.msra.mxu0 0.0
        %810 = vmatprep.mubr.f32.mxu0 0.0
        %811 = vmatmul.mubr.f32.gmra.mrb[0].mxu0 %v744
        %v812 = vpop.f32.mrb[0].mxu0
        %v813 = vadd.f32 0.0, %v812
        %v814 = vpop.f32.mrb[0].mxu0
        %v815 = vadd.f32 0.0, %v814
        %816 = vdwg.mxu0
        %817 = vmatprep.subr.mxu0 %v456
        %818 = vmatpush1.msra.mxu0 %v455
        %819 = vmatprep.subr.mxu0 %v458
        %820 = vmatpush1.msra.mxu0 %v457
        %821 = vmatprep.subr.mxu0 %v460
        %822 = vmatpush1.msra.mxu0 %v459
        %823 = vmatprep.subr.mxu0 %v462
        %824 = vmatpush1.msra.mxu0 %v461
        %825 = vmatprep.subr.mxu0 0.0
        %826 = vmatpush1.msra.mxu0 0.0
        %827 = vmatprep.subr.mxu0 0.0
        %828 = vmatpush1.msra.mxu0 0.0
        %829 = vmatprep.subr.mxu0 0.0
        %830 = vmatpush1.msra.mxu0 0.0
        %831 = vmatprep.subr.mxu0 0.0
        %832 = vmatpush1.msra.mxu0 0.0
        %833 = vmatprep.subr.mxu0 0.0
        %834 = vmatpush1.msra.mxu0 0.0
        %835 = vmatprep.subr.mxu0 0.0
        %836 = vmatpush1.msra.mxu0 0.0
        %837 = vmatprep.subr.mxu0 0.0
        %838 = vmatpush1.msra.mxu0 0.0
        %839 = vmatprep.subr.mxu0 0.0
        %840 = vmatpush1.msra.mxu0 0.0
        %841 = vmatprep.subr.mxu0 0.0
        %842 = vmatpush1.msra.mxu0 0.0
        %843 = vmatprep.subr.mxu0 0.0
        %844 = vmatpush1.msra.mxu0 0.0
        %845 = vmatprep.subr.mxu0 0.0
        %846 = vmatpush1.msra.mxu0 0.0
        %847 = vmatprep.subr.mxu0 0.0
        %848 = vmatpush1.msra.mxu0 0.0
        %849 = vmatprep.subr.mxu0 0.0
        %850 = vmatpush1.msra.mxu0 0.0
        %851 = vmatprep.subr.mxu0 0.0
        %852 = vmatpush1.msra.mxu0 0.0
        %853 = vmatprep.subr.mxu0 0.0
        %854 = vmatpush1.msra.mxu0 0.0
        %855 = vmatprep.subr.mxu0 0.0
        %856 = vmatpush1.msra.mxu0 0.0
        %857 = vmatprep.subr.mxu0 0.0
        %858 = vmatpush1.msra.mxu0 0.0
        %859 = vmatprep.subr.mxu0 0.0
        %860 = vmatpush1.msra.mxu0 0.0
        %861 = vmatprep.subr.mxu0 0.0
        %862 = vmatpush1.msra.mxu0 0.0
        %863 = vmatprep.subr.mxu0 0.0
        %864 = vmatpush1.msra.mxu0 0.0
        %865 = vmatprep.subr.mxu0 0.0
        %866 = vmatpush1.msra.mxu0 0.0
        %867 = vmatprep.subr.mxu0 0.0
        %868 = vmatpush1.msra.mxu0 0.0
        %869 = vmatprep.subr.mxu0 0.0
        %870 = vmatpush1.msra.mxu0 0.0
        %871 = vmatprep.subr.mxu0 0.0
        %872 = vmatpush1.msra.mxu0 0.0
        %873 = vmatprep.subr.mxu0 0.0
        %874 = vmatpush1.msra.mxu0 0.0
        %875 = vmatprep.subr.mxu0 0.0
        %876 = vmatpush1.msra.mxu0 0.0
        %877 = vmatprep.subr.mxu0 0.0
        %878 = vmatpush1.msra.mxu0 0.0
        %879 = vmatprep.subr.mxu0 0.0
        %880 = vmatpush1.msra.mxu0 0.0
        %881 = vmatprep.mubr.f32.mxu0 0.0
        %882 = vmatmul.mubr.f32.gmra.mrb[0].mxu0 %v744
        %v883 = vpop.f32.mrb[0].mxu0
        %v884 = vadd.f32 %v813, %v883
        %v885 = vpop.f32.mrb[0].mxu0
        %v886 = vadd.f32 %v815, %v885
        %887 = vdwg.mxu0
        %888 = vst [vmem:[%s164] sm:$0xff] %v884
        %889 = vst [vmem:[%s164 + $0x8] sm:$0xff] %v886
        %s890 = sand.u32 %s93, 1
        %s891 = scalar_lea.sflag [#allocation3], %s890
        %s892 = sand.u32 %s93, 1
        %s893 = smul.addr %s892, 16
        %s894 = scalar_lea.vmem [#allocation2], %s893
        // Predicated region
        $region33: #{tpu_custom_call.1} parent=31 // pred_check
          %p895 = pneg %p103
        $region34: #{tpu_custom_call.1} parent=31 // pred_check_branch
          %897 = sbr.rel (%p895) target = $region36
        $region35: #{tpu_custom_call.1} parent=31 // pred_region
          %s898 = smul.u32 2, %s17
          %s900 = ssub.s32 256, 256
          %901 = vsyncadd %s891, %s900
          %s902 = smul.addr %s898, 128
          %s903 = scalar_lea.hbm %s3, %s902
          %s905 = sshll.u32 %s894, 4
          %s906 = int_to_ptr.vmem [resolvable:$true] %s905
          %908 = dma.vmem_to_hbm [thread:$0]  %s906, 256, %s903, %s891
        $region36: #{tpu_custom_call.1} parent=31 // pred_fallthru
          _
      $region32: #{tpu_custom_call.1} parent=5 // pred_fallthru
        _
      %p909 = scmp.le.s32.totalorder 2, %s12
      // Predicated region
      $region37: #{tpu_custom_call.1} parent=5 // pred_check
        %p910 = pneg %p909
      $region38: #{tpu_custom_call.1} parent=5 // pred_check_branch
        %912 = sbr.rel (%p910) target = $region40
      $region39: #{tpu_custom_call.1} parent=5 // pred_region
        %s913 = ssub.s32 %s12, 2
        // Predicated region
        $region41: #{tpu_custom_call.1} parent=39 // pred_check
          %p914 = pneg %p109
        $region42: #{tpu_custom_call.1} parent=39 // pred_check_branch
          %916 = sbr.rel (%p914) target = $region44
        $region43: #{tpu_custom_call.1} parent=39 // pred_region
          %s917 = sand.u32 %s94, 1
          %s918 = scalar_lea.sflag [#allocation3], %s917
          %s919 = sand.u32 %s94, 1
          %s920 = smul.addr %s919, 16
          %s921 = scalar_lea.vmem [#allocation2], %s920
          %922 = dma.done %s918, 256
        $region44: #{tpu_custom_call.1} parent=39 // pred_fallthru
          _
      $region40: #{tpu_custom_call.1} parent=5 // pred_fallthru
        _
    $region6: #{tpu_custom_call.1} parent=1 // loop_footer
      %s16 = sadd.s32 1, %s12
    $region7: #{tpu_custom_call.1} parent=1 // loop_footer_branch
      %11 = sbr.rel target = $region3
    $region8: #{tpu_custom_call.1} parent=1 // loop_exit
      _
    %923 = vsyncpa [#allocation3], 1
    %s924 = scalar_lea.sflag [#allocation3], 1
    %925 = vsyncpa %s924, 1

</llo_original>
